<compile_context>
chip_gen: v7x
topology: tpu7x:2x2x1
jax: 0.10.0
libtpu: 0.0.40
codegen_flags: <defaults>
</compile_context>

<pallas_src>
import math
import jax
import jax.numpy as jnp
from jax.experimental import pallas as pl
from jax.experimental.pallas import tpu as pltpu

MIB = 1024 * 1024


def _round_up(x, m):
    return ((x + m - 1) // m) * m


def _pick_tile(total, candidates, min_blocks=1):
    """Largest candidate dividing `total` that leaves >= min_blocks blocks."""
    for c in candidates:
        if total % c == 0 and total // c >= min_blocks:
            return c
    return 128  # always divides: `total` is a multiple of 128


# ---------------- Stage 1: support = X @ W ----------------
def _support_kernel_direct(x_ref, w_ref, o_ref):
    # f32 output block, constant index across k -> acts as the accumulator.
    k = pl.program_id(1)

    @pl.when(k == 0)
    def _():
        o_ref[...] = jnp.zeros_like(o_ref)

    o_ref[...] += jnp.dot(x_ref[...], w_ref[...],
                          preferred_element_type=jnp.float32)


def _support_kernel_scratch(x_ref, w_ref, o_ref, acc_ref):
    # Only used when support is stored in bf16 (non-resident, huge problems):
    # accumulate in f32 scratch, cast once at the end.
    k = pl.program_id(1)

    @pl.when(k == 0)
    def _():
        acc_ref[...] = jnp.zeros_like(acc_ref)

    acc_ref[...] += jnp.dot(x_ref[...], w_ref[...],
                            preferred_element_type=jnp.float32)

    @pl.when(k == pl.num_programs(1) - 1)
    def _():
        o_ref[...] = acc_ref[...].astype(o_ref.dtype)


# ---------------- Stage 2: out = adj @ support + bias ----------------
def _make_aggregate_kernel(tk, resident, dot_dtype):
    def kernel(adj_ref, s_ref, b_ref, o_ref):
        k = pl.program_id(1)

        @pl.when(k == 0)
        def _():
            # Seed the resident f32 output block with the bias: no scratch
            # accumulator and no epilogue add/copy.
            o_ref[...] = jnp.broadcast_to(b_ref[...], o_ref.shape)

        a = adj_ref[...]
        if a.dtype != dot_dtype:
            a = a.astype(dot_dtype)

        if resident:
            start = pl.multiple_of(k * tk, 128)
            s = s_ref[pl.ds(start, tk), :]
        else:
            s = s_ref[...]
        if s.dtype != dot_dtype:
            s = s.astype(dot_dtype)

        o_ref[...] += jnp.dot(a, s, preferred_element_type=jnp.float32)

    return kernel


def graph_convolution(x, weight, adj, bias, *, compute_dtype=jnp.bfloat16):
    """GCN layer forward: adj @ (x @ weight) + bias.

    x: [N, in_f], weight: [in_f, out_f], adj: [N, N] (dense), bias: [out_f]
    returns: [N, out_f] float32
    """
    n, in_f = x.shape
    out_f = weight.shape[1]
    f32 = jnp.float32

    in_f_p = _round_up(in_f, 128)
    out_f_p = _round_up(out_f, 128)
    n_p = _round_up(n, 128)
    c_isz = jnp.dtype(compute_dtype).itemsize

    # ---- adjacency: avoid the padded/cast HBM copy whenever possible --------
    # Stage 2 is HBM-bound; an XLA-side pad/cast of adj costs ~2-3x the
    # kernel's own adj traffic. If N is already lane-aligned we stream adj in
    # its native dtype and cast the tile in-kernel.
    if n == n_p:
        adj_in = adj
    else:
        adj_in = jnp.zeros((n_p, n_p), compute_dtype).at[:n, :n].set(
            adj.astype(compute_dtype))
    adj_isz = jnp.dtype(adj_in.dtype).itemsize

    # X / W are small next to adj; pad + cast only when needed.
    if (n, in_f) == (n_p, in_f_p) and x.dtype == compute_dtype:
        x_p = x
    else:
        x_p = jnp.zeros((n_p, in_f_p), compute_dtype).at[:n, :in_f].set(
            x.astype(compute_dtype))
    if (in_f, out_f) == (in_f_p, out_f_p) and weight.dtype == compute_dtype:
        w_p = weight
    else:
        w_p = jnp.zeros((in_f_p, out_f_p), compute_dtype).at[:in_f, :out_f].set(
            weight.astype(compute_dtype))
    b_p = jnp.zeros((1, out_f_p), f32).at[0, :out_f].set(bias.astype(f32))

    # ---- support residency & dtype ------------------------------------------
    # Keep support f32 + fully VMEM-resident in stage 2 when it fits
    # (double-buffered budget <= 24 MiB): fetched once, no re-stream per row
    # tile, and one fewer bf16 rounding step.
    support_resident = 2 * n_p * out_f_p * 4 <= 24 * MIB
    support_dtype = f32 if support_resident else compute_dtype
    s_isz = jnp.dtype(support_dtype).itemsize

    # ---- tiles ---------------------------------------------------------------
    # Keep >= 2 row blocks when possible so v7x's two TensorCores both get work.
    min_row_blocks = 2 if n_p >= 256 else 1
    tm = _pick_tile(n_p, (1024, 512, 256, 128), min_row_blocks)
    # Adjacency contraction tile: as large as possible (amortizes the
    # ~0.35 us/step overhead) subject to a 16 MiB double-buffered adj budget.
    tk = 128
    for c in (n_p, 2048, 1024, 512, 256, 128):
        if c <= n_p and n_p % c == 0 and 2 * tm * c * adj_isz <= 16 * MIB:
            tk = c
            break

    # Stage-1 tiles: k-tile in_f so the (double-buffered) weight block stays
    # <= 8 MiB (guards v7x's 64 MiB VMEM for large weights).
    tm1 = _pick_tile(n_p, (512, 256, 128), min_row_blocks)
    tk1 = 128
    for c in (in_f_p, 1024, 512, 256, 128):
        if c <= in_f_p and in_f_p % c == 0 and 2 * c * out_f_p * c_isz <= 8 * MIB:
            tk1 = c
            break
    # TODO(synk): if out_f_p is so large that even a (128, out_f_p) weight tile
    # exceeds VMEM, add an output-feature grid axis in stage 1.
    nk1 = in_f_p // tk1
    n_row1 = n_p // tm1

    # ---- Stage 1: support = X @ W -------------------------------------------
    use_scratch = support_dtype != f32
    kernel1 = _support_kernel_scratch if use_scratch else _support_kernel_direct
    scratch1 = [pltpu.VMEM((tm1, out_f_p), f32)] if use_scratch else []

    vmem1 = int(2 * (tm1 * tk1 * c_isz
                     + tk1 * out_f_p * c_isz
                     + tm1 * out_f_p * s_isz)
                + (tm1 * out_f_p * 4 if use_scratch else 0)
                + 4 * MIB)
    w_reads = 1 if nk1 == 1 else n_row1

    support = pl.pallas_call(
        kernel1,
        out_shape=jax.ShapeDtypeStruct((n_p, out_f_p), support_dtype),
        grid_spec=pltpu.PrefetchScalarGridSpec(
            num_scalar_prefetch=0,
            grid=(n_row1, nk1),
            in_specs=[
                pl.BlockSpec((tm1, tk1), lambda i, k: (i, k)),
                pl.BlockSpec((tk1, out_f_p), lambda i, k: (k, 0)),
            ],
            out_specs=pl.BlockSpec((tm1, out_f_p), lambda i, k: (i, 0)),
            scratch_shapes=scratch1,
        ),
        compiler_params=pltpu.CompilerParams(
            dimension_semantics=("parallel", "arbitrary"),
            vmem_limit_bytes=min(vmem1, 100 * MIB),
        ),
        cost_estimate=pl.CostEstimate(
            flops=2 * n_p * in_f_p * out_f_p,
            transcendentals=0,
            bytes_accessed=int(n_p * in_f_p * c_isz
                               + w_reads * in_f_p * out_f_p * c_isz
                               + n_p * out_f_p * s_isz),
        ),
    )(x_p, w_p)

    # ---- Stage 2: out = adj @ support + bias --------------------------------
    n_row = n_p // tm
    nk = n_p // tk
    kernel2 = _make_aggregate_kernel(tk, support_resident, support_dtype)

    if support_resident:
        s_spec = pl.BlockSpec((n_p, out_f_p), lambda i, k: (0, 0))
        s_vmem = 2 * n_p * out_f_p * s_isz
        s_reads = 1
    else:
        s_spec = pl.BlockSpec((tk, out_f_p), lambda i, k: (k, 0))
        s_vmem = 2 * tk * out_f_p * s_isz
        s_reads = n_row

    vmem2 = int(2 * tm * tk * adj_isz
                + s_vmem
                + 2 * tm * out_f_p * 4
                + 2 * out_f_p * 4
                + 4 * MIB)

    out_p = pl.pallas_call(
        kernel2,
        out_shape=jax.ShapeDtypeStruct((n_p, out_f_p), f32),
        grid_spec=pltpu.PrefetchScalarGridSpec(
            num_scalar_prefetch=0,
            grid=(n_row, nk),
            in_specs=[
                pl.BlockSpec((tm, tk), lambda i, k: (i, k)),
                s_spec,
                pl.BlockSpec((1, out_f_p), lambda i, k: (0, 0)),
            ],
            out_specs=pl.BlockSpec((tm, out_f_p), lambda i, k: (i, 0)),
        ),
        compiler_params=pltpu.CompilerParams(
            dimension_semantics=("parallel", "arbitrary"),
            vmem_limit_bytes=min(vmem2, 100 * MIB),
        ),
        cost_estimate=pl.CostEstimate(
            flops=2 * n_p * n_p * out_f_p,
            transcendentals=0,
            bytes_accessed=int(n_p * n_p * adj_isz
                               + s_reads * n_p * out_f_p * s_isz
                               + out_f_p * 4
                               + n_p * out_f_p * 4),
        ),
    )(adj_in, support, b_p)

    return out_p[:n, :out_f]


if __name__ == "__main__":
    key = jax.random.PRNGKey(0)

    def make_problem(k, n, in_features, out_features):
        k_x, k_adj, k_w, k_b = jax.random.split(k, 4)
        # reset_parameters(): uniform(-stdv, stdv), stdv = 1/sqrt(out_features)
        stdv = 1.0 / math.sqrt(out_features)
        weight = jax.random.uniform(
            k_w, (in_features, out_features), jnp.float32, minval=-stdv, maxval=stdv)
        bias = jax.random.uniform(
            k_b, (out_features,), jnp.float32, minval=-stdv, maxval=stdv)
        x = jax.random.normal(k_x, (n, in_features), jnp.float32)
        adj_raw = jax.random.uniform(k_adj, (n, n), jnp.float32)
        adj = adj_raw / jnp.sum(adj_raw, axis=1, keepdims=True)
        return x, weight, adj, bias

    k1, k2 = jax.random.split(key)

    # 1) Small shape from the module (N=16, 32 -> 8), f32 path: exact
    #    torch.FloatTensor semantics, strict check (exercises padding).
    x, w, adj, b = make_problem(k1, 16, 32, 8)
    out = jax.block_until_ready(
        graph_convolution(x, w, adj, b, compute_dtype=jnp.float32))
    ref = adj @ (x @ w) + b
    assert out.shape == (16, 8)
    assert jnp.allclose(out, ref, atol=1e-3, rtol=1e-3), \
        float(jnp.max(jnp.abs(out - ref)))

    # 2) Larger shape exercising multi-row-tiles, out_f padding, the zero-copy
    #    adj path (N % 128 == 0, adj pre-cast to bf16 by the caller) and the
    #    VMEM-resident f32 support path.
    x2, w2, adj2, b2 = make_problem(k2, 384, 64, 200)
    out2 = jax.block_until_ready(
        graph_convolution(x2, w2, adj2.astype(jnp.bfloat16), b2,
                          compute_dtype=jnp.bfloat16))
    ref2 = adj2 @ (x2 @ w2) + b2
    assert out2.shape == (384, 200)
    assert jnp.allclose(out2, ref2, atol=6e-2, rtol=6e-2), \
        float(jnp.max(jnp.abs(out2 - ref2)))

    print("KERNEL_OK")
</pallas_src>

<mosaic_0001>
module attributes {stable_mosaic.version = 11 : i64} {
  func.func @_support_kernel_direct(%arg0: i32, %arg1: i32, %arg2: memref<128x128xf32, #tpu.memory_space<vmem>>, %arg3: memref<128x128xf32, #tpu.memory_space<vmem>>, %arg4: memref<128x128xf32, #tpu.memory_space<vmem>>) attributes {dimension_semantics = [#tpu.dimension_semantics<parallel>, #tpu.dimension_semantics<arbitrary>], iteration_bounds = array<i64: 1, 1>, scalar_prefetch = 0 : i64, scratch_operands = 0 : i64, tpu.core_type = #tpu.core_type<tc>, window_params = [{transform_indices = @transform_0, window_bounds = array<i64: 128, 128>}, {transform_indices = @transform_1, window_bounds = array<i64: 128, 128>}, {transform_indices = @transform_2, window_bounds = array<i64: 128, 128>}]} {
    %c0_i32 = arith.constant 0 : i32
    %0 = arith.cmpi eq, %arg1, %c0_i32 : i32
    %1 = arith.extui %0 : i1 to i32
    %c0_i32_0 = arith.constant 0 : i32
    %2 = arith.cmpi ne, %1, %c0_i32_0 : i32
    scf.if %2 {
      %cst_8 = arith.constant 0.000000e+00 : f32
      %9 = vector.broadcast %cst_8 : f32 to vector<128x128xf32>
      %c0_9 = arith.constant 0 : index
      %c0_10 = arith.constant 0 : index
      %10 = vector.load %arg4[%c0_9, %c0_10] : memref<128x128xf32, #tpu.memory_space<vmem>>, vector<128x128xf32>
      tpu.vector_store %arg4[%c0_9, %c0_10], %9 {strides = array<i32>} : memref<128x128xf32, #tpu.memory_space<vmem>>, vector<128x128xf32>,
    } else {
    }
    %c0 = arith.constant 0 : index
    %c0_1 = arith.constant 0 : index
    %3 = vector.load %arg4[%c0, %c0_1] : memref<128x128xf32, #tpu.memory_space<vmem>>, vector<128x128xf32>
    %c0_2 = arith.constant 0 : index
    %c0_3 = arith.constant 0 : index
    %4 = vector.load %arg2[%c0_2, %c0_3] : memref<128x128xf32, #tpu.memory_space<vmem>>, vector<128x128xf32>
    %c0_4 = arith.constant 0 : index
    %c0_5 = arith.constant 0 : index
    %5 = vector.load %arg3[%c0_4, %c0_5] : memref<128x128xf32, #tpu.memory_space<vmem>>, vector<128x128xf32>
    %cst = arith.constant dense<0.000000e+00> : vector<128x128xf32>
    %6 = tpu.matmul %4, %5, %cst {dimension_numbers = #tpu.dot_dimension_numbers<[1], [0], [0], [1], [0, 0, 1, 1], [], []>} : vector<128x128xf32>, vector<128x128xf32>, vector<128x128xf32> -> vector<128x128xf32>
    %7 = arith.addf %3, %6 : vector<128x128xf32>
    %c0_6 = arith.constant 0 : index
    %c0_7 = arith.constant 0 : index
    %8 = vector.load %arg4[%c0_6, %c0_7] : memref<128x128xf32, #tpu.memory_space<vmem>>, vector<128x128xf32>
    tpu.vector_store %arg4[%c0_6, %c0_7], %7 {strides = array<i32>} : memref<128x128xf32, #tpu.memory_space<vmem>>, vector<128x128xf32>,
    return
  }
  func.func @transform_0(%arg0: i32, %arg1: i32) -> (i32, i32) {
    %c0_i32 = arith.constant 0 : i32
    return %arg0, %arg1 : i32, i32
  }
  func.func @transform_1(%arg0: i32, %arg1: i32) -> (i32, i32) {
    %c0_i32 = arith.constant 0 : i32
    %c0_i32_0 = arith.constant 0 : i32
    return %arg1, %c0_i32 : i32, i32
  }
  func.func @transform_2(%arg0: i32, %arg1: i32) -> (i32, i32) {
    %c0_i32 = arith.constant 0 : i32
    %c0_i32_0 = arith.constant 0 : i32
    return %arg0, %c0_i32 : i32, i32
  }
}

</mosaic_0001>

<llo_original>
// kernel: tpu_custom_call.1
$region0: #{tpu_custom_call.1}
  #allocation0 [shape = 'u32[]', space=smem, size = 0x4, offset = 0x4, fixed_abs, tag = 'smem constant byte address 0x4 - core index']
  #allocation1 [shape = 'u32[144,128]{1,0:T(1,128)}', space=vmem, size = 0x12000, scoped, tag = 'internal scratch']
  %s0 = inlined_call_operand.hbm [shape: f32[128,128], index: 0, kind: input, shape index: {}]
  %s1 = inlined_call_operand.hbm [shape: f32[128,128], index: 1, kind: input, shape index: {}]
  %s2 = inlined_call_operand.hbm [shape: f32[128,128], index: 2, kind: output, shape index: {}]
  %s3 = sld [smem:[#allocation0]]
  $region30: #{tpu_custom_call.1} parent=0
    _
  %s5 = ssub.s32 1, %s3
  %s6 = scalar_select 0, %s5, %s3
  $region1: #{tpu_custom_call.1} parent=0
    #allocation2 [shape = 'u8[65536]{0}', space=vmem, size = 0x10000, scoped, tag = 'input window, operand 0, single buffered']
    #allocation3 [shape = 's32[1]{0}', space=sflag, size = 0x4, scoped, tag = 'scoped memory for tpu_custom_call.1']
    #allocation4 [shape = 's32[1]{0}', space=sflag, size = 0x4, scoped, tag = 'scoped memory for tpu_custom_call.1']
    #allocation5 [shape = 'u8[65536]{0}', space=vmem, size = 0x10000, scoped, tag = 'input window, operand 1, single buffered']
    #allocation6 [shape = 's32[1]{0}', space=sflag, size = 0x4, scoped, tag = 'scoped memory for tpu_custom_call.1']
    #allocation7 [shape = 'u8[65536]{0}', space=vmem, size = 0x10000, scoped, tag = 'output window, operand 0, single buffered']
    %7 = vsyncpa [#allocation3], 0
    %8 = vsyncpa [#allocation6], 0
    %9 = vsyncpa [#allocation4], 0
    // Predicated region
    $region2: #{tpu_custom_call.1} parent=1 // pred_check
      _
    $region3: #{tpu_custom_call.1} parent=1 // pred_check_branch
      %11 = sbr.rel (0) target = $region5
    $region4: #{tpu_custom_call.1} parent=1 // pred_region
      %s13 = ssub.s32 2048, 2048
      %14 = vsyncadd [#allocation3], %s13
      %s15 = sshll.u32 [#allocation2], 4
      %s16 = int_to_ptr.vmem [resolvable:$true] %s15
      %21 = dma.hbm_to_vmem [thread:$0]  %s0, 2048, %s16, [#allocation3], 128, 128, 8
    $region5: #{tpu_custom_call.1} parent=1 // pred_fallthru
      _
    // Predicated region
    $region6: #{tpu_custom_call.1} parent=1 // pred_check
      _
    $region7: #{tpu_custom_call.1} parent=1 // pred_check_branch
      %23 = sbr.rel (0) target = $region9
    $region8: #{tpu_custom_call.1} parent=1 // pred_region
      %s25 = ssub.s32 2048, 2048
      %26 = vsyncadd [#allocation6], %s25
      %s27 = sshll.u32 [#allocation5], 4
      %s28 = int_to_ptr.vmem [resolvable:$true] %s27
      %33 = dma.hbm_to_vmem [thread:$0]  %s1, 2048, %s28, [#allocation6], 128, 128, 8
    $region9: #{tpu_custom_call.1} parent=1 // pred_fallthru
      _
    // Predicated region
    $region10: #{tpu_custom_call.1} parent=1 // pred_check
      _
    $region11: #{tpu_custom_call.1} parent=1 // pred_check_branch
      %35 = sbr.rel (0) target = $region13
    $region12: #{tpu_custom_call.1} parent=1 // pred_region
      %36 = dma.done [#allocation3], 2048
    $region13: #{tpu_custom_call.1} parent=1 // pred_fallthru
      _
    // Predicated region
    $region14: #{tpu_custom_call.1} parent=1 // pred_check
      _
    $region15: #{tpu_custom_call.1} parent=1 // pred_check_branch
      %38 = sbr.rel (0) target = $region17
    $region16: #{tpu_custom_call.1} parent=1 // pred_region
      %39 = dma.done [#allocation6], 2048
    $region17: #{tpu_custom_call.1} parent=1 // pred_fallthru
      _
    %p40 = scmp.eq.s32.totalorder 0, 0
    // Predicated region
    $region18: #{tpu_custom_call.1} parent=1 // pred_check
      %p41 = pneg %p40
    $region19: #{tpu_custom_call.1} parent=1 // pred_check_branch
      %43 = sbr.rel (%p41) target = $region21
    $region20: #{tpu_custom_call.1} parent=1 // pred_region
      %44 = vst [vmem:[#allocation7] sm:$0xff] 0.0
      %45 = vst [vmem:[#allocation7 + $0x8] sm:$0xff] 0.0
      %46 = vst [vmem:[#allocation7 + $0x10] sm:$0xff] 0.0
      %47 = vst [vmem:[#allocation7 + $0x18] sm:$0xff] 0.0
      %48 = vst [vmem:[#allocation7 + $0x20] sm:$0xff] 0.0
      %49 = vst [vmem:[#allocation7 + $0x28] sm:$0xff] 0.0
      %50 = vst [vmem:[#allocation7 + $0x30] sm:$0xff] 0.0
      %51 = vst [vmem:[#allocation7 + $0x38] sm:$0xff] 0.0
      %52 = vst [vmem:[#allocation7 + $0x40] sm:$0xff] 0.0
      %53 = vst [vmem:[#allocation7 + $0x48] sm:$0xff] 0.0
      %54 = vst [vmem:[#allocation7 + $0x50] sm:$0xff] 0.0
      %55 = vst [vmem:[#allocation7 + $0x58] sm:$0xff] 0.0
      %56 = vst [vmem:[#allocation7 + $0x60] sm:$0xff] 0.0
      %57 = vst [vmem:[#allocation7 + $0x68] sm:$0xff] 0.0
      %58 = vst [vmem:[#allocation7 + $0x70] sm:$0xff] 0.0
      %59 = vst [vmem:[#allocation7 + $0x78] sm:$0xff] 0.0
    $region21: #{tpu_custom_call.1} parent=1 // pred_fallthru
      _
    %v60 = vld [vmem:[#allocation7] sm:$0xff]
    %v61 = vld [vmem:[#allocation7 + $0x8] sm:$0xff]
    %v62 = vld [vmem:[#allocation7 + $0x10] sm:$0xff]
    %v63 = vld [vmem:[#allocation7 + $0x18] sm:$0xff]
    %v64 = vld [vmem:[#allocation7 + $0x20] sm:$0xff]
    %v65 = vld [vmem:[#allocation7 + $0x28] sm:$0xff]
    %v66 = vld [vmem:[#allocation7 + $0x30] sm:$0xff]
    %v67 = vld [vmem:[#allocation7 + $0x38] sm:$0xff]
    %v68 = vld [vmem:[#allocation7 + $0x40] sm:$0xff]
    %v69 = vld [vmem:[#allocation7 + $0x48] sm:$0xff]
    %v70 = vld [vmem:[#allocation7 + $0x50] sm:$0xff]
    %v71 = vld [vmem:[#allocation7 + $0x58] sm:$0xff]
    %v72 = vld [vmem:[#allocation7 + $0x60] sm:$0xff]
    %v73 = vld [vmem:[#allocation7 + $0x68] sm:$0xff]
    %v74 = vld [vmem:[#allocation7 + $0x70] sm:$0xff]
    %v75 = vld [vmem:[#allocation7 + $0x78] sm:$0xff]
    %v76 = vld [vmem:[#allocation2] sm:$0xff]
    %v77 = vld [vmem:[#allocation2 + $0x8] sm:$0xff]
    %v78 = vld [vmem:[#allocation2 + $0x10] sm:$0xff]
    %v79 = vld [vmem:[#allocation2 + $0x18] sm:$0xff]
    %v80 = vld [vmem:[#allocation2 + $0x20] sm:$0xff]
    %v81 = vld [vmem:[#allocation2 + $0x28] sm:$0xff]
    %v82 = vld [vmem:[#allocation2 + $0x30] sm:$0xff]
    %v83 = vld [vmem:[#allocation2 + $0x38] sm:$0xff]
    %v84 = vld [vmem:[#allocation2 + $0x40] sm:$0xff]
    %v85 = vld [vmem:[#allocation2 + $0x48] sm:$0xff]
    %v86 = vld [vmem:[#allocation2 + $0x50] sm:$0xff]
    %v87 = vld [vmem:[#allocation2 + $0x58] sm:$0xff]
    %v88 = vld [vmem:[#allocation2 + $0x60] sm:$0xff]
    %v89 = vld [vmem:[#allocation2 + $0x68] sm:$0xff]
    %v90 = vld [vmem:[#allocation2 + $0x70] sm:$0xff]
    %v91 = vld [vmem:[#allocation2 + $0x78] sm:$0xff]
    %v92 = vld [vmem:[#allocation5] sm:$0xff]
    %v93 = vld [vmem:[#allocation5 + $0x8] sm:$0xff]
    %v94 = vld [vmem:[#allocation5 + $0x10] sm:$0xff]
    %v95 = vld [vmem:[#allocation5 + $0x18] sm:$0xff]
    %v96 = vld [vmem:[#allocation5 + $0x20] sm:$0xff]
    %v97 = vld [vmem:[#allocation5 + $0x28] sm:$0xff]
    %v98 = vld [vmem:[#allocation5 + $0x30] sm:$0xff]
    %v99 = vld [vmem:[#allocation5 + $0x38] sm:$0xff]
    %v100 = vld [vmem:[#allocation5 + $0x40] sm:$0xff]
    %v101 = vld [vmem:[#allocation5 + $0x48] sm:$0xff]
    %v102 = vld [vmem:[#allocation5 + $0x50] sm:$0xff]
    %v103 = vld [vmem:[#allocation5 + $0x58] sm:$0xff]
    %v104 = vld [vmem:[#allocation5 + $0x60] sm:$0xff]
    %v105 = vld [vmem:[#allocation5 + $0x68] sm:$0xff]
    %v106 = vld [vmem:[#allocation5 + $0x70] sm:$0xff]
    %v107 = vld [vmem:[#allocation5 + $0x78] sm:$0xff]
    %108 = vmatprep.subr.mxu0 0.0
    %109 = vmatpush1.msra.mxu0 %v92
    %110 = vmatprep.subr.mxu0 0.0
    %111 = vmatpush1.msra.mxu0 %v93
    %112 = vmatprep.subr.mxu0 0.0
    %113 = vmatpush1.msra.mxu0 %v94
    %114 = vmatprep.subr.mxu0 0.0
    %115 = vmatpush1.msra.mxu0 %v95
    %116 = vmatprep.subr.mxu0 0.0
    %117 = vmatpush1.msra.mxu0 %v96
    %118 = vmatprep.subr.mxu0 0.0
    %119 = vmatpush1.msra.mxu0 %v97
    %120 = vmatprep.subr.mxu0 0.0
    %121 = vmatpush1.msra.mxu0 %v98
    %122 = vmatprep.subr.mxu0 0.0
    %123 = vmatpush1.msra.mxu0 %v99
    %124 = vmatprep.subr.mxu0 0.0
    %125 = vmatpush1.msra.mxu0 %v100
    %126 = vmatprep.subr.mxu0 0.0
    %127 = vmatpush1.msra.mxu0 %v101
    %128 = vmatprep.subr.mxu0 0.0
    %129 = vmatpush1.msra.mxu0 %v102
    %130 = vmatprep.subr.mxu0 0.0
    %131 = vmatpush1.msra.mxu0 %v103
    %132 = vmatprep.subr.mxu0 0.0
    %133 = vmatpush1.msra.mxu0 %v104
    %134 = vmatprep.subr.mxu0 0.0
    %135 = vmatpush1.msra.mxu0 %v105
    %136 = vmatprep.subr.mxu0 0.0
    %137 = vmatpush1.msra.mxu0 %v106
    %138 = vmatprep.subr.mxu0 0.0
    %139 = vmatpush1.msra.mxu0 %v107
    %140 = vmatprep.subr.mxu0 0.0
    %141 = vmatpush1.msra.mxu0 0.0
    %142 = vmatprep.subr.mxu0 0.0
    %143 = vmatpush1.msra.mxu0 0.0
    %144 = vmatprep.subr.mxu0 0.0
    %145 = vmatpush1.msra.mxu0 0.0
    %146 = vmatprep.subr.mxu0 0.0
    %147 = vmatpush1.msra.mxu0 0.0
    %148 = vmatprep.subr.mxu0 0.0
    %149 = vmatpush1.msra.mxu0 0.0
    %150 = vmatprep.subr.mxu0 0.0
    %151 = vmatpush1.msra.mxu0 0.0
    %152 = vmatprep.subr.mxu0 0.0
    %153 = vmatpush1.msra.mxu0 0.0
    %154 = vmatprep.subr.mxu0 0.0
    %155 = vmatpush1.msra.mxu0 0.0
    %156 = vmatprep.subr.mxu0 0.0
    %157 = vmatpush1.msra.mxu0 0.0
    %158 = vmatprep.subr.mxu0 0.0
    %159 = vmatpush1.msra.mxu0 0.0
    %160 = vmatprep.subr.mxu0 0.0
    %161 = vmatpush1.msra.mxu0 0.0
    %162 = vmatprep.subr.mxu0 0.0
    %163 = vmatpush1.msra.mxu0 0.0
    %164 = vmatprep.subr.mxu0 0.0
    %165 = vmatpush1.msra.mxu0 0.0
    %166 = vmatprep.subr.mxu0 0.0
    %167 = vmatpush1.msra.mxu0 0.0
    %168 = vmatprep.subr.mxu0 0.0
    %169 = vmatpush1.msra.mxu0 0.0
    %170 = vmatprep.subr.mxu0 0.0
    %171 = vmatpush1.msra.mxu0 0.0
    %172 = vmatprep.mubr.f32.mxu0 0.0
    %173 = vmatmul.mubr.f32.gmra.mrb[0].mxu0 %v76
    %v174 = vpop.f32.mrb[0].mxu0
    %v175 = vadd.f32 0.0, %v174
    %v176 = vpop.f32.mrb[0].mxu0
    %177 = vmatprep.mubr.f32.mxu0 0.0
    %178 = vmatmul.mubr.f32.gmra.mrb[0].mxu0 %v77
    %v179 = vpop.f32.mrb[0].mxu0
    %v180 = vadd.f32 0.0, %v179
    %v181 = vpop.f32.mrb[0].mxu0
    %182 = vmatprep.mubr.f32.mxu0 0.0
    %183 = vmatmul.mubr.f32.gmra.mrb[0].mxu0 %v78
    %v184 = vpop.f32.mrb[0].mxu0
    %v185 = vadd.f32 0.0, %v184
    %v186 = vpop.f32.mrb[0].mxu0
    %187 = vmatprep.mubr.f32.mxu0 0.0
    %188 = vmatmul.mubr.f32.gmra.mrb[0].mxu0 %v79
    %v189 = vpop.f32.mrb[0].mxu0
    %v190 = vadd.f32 0.0, %v189
    %v191 = vpop.f32.mrb[0].mxu0
    %192 = vmatprep.mubr.f32.mxu0 0.0
    %193 = vmatmul.mubr.f32.gmra.mrb[0].mxu0 %v80
    %v194 = vpop.f32.mrb[0].mxu0
    %v195 = vadd.f32 0.0, %v194
    %v196 = vpop.f32.mrb[0].mxu0
    %197 = vmatprep.mubr.f32.mxu0 0.0
    %198 = vmatmul.mubr.f32.gmra.mrb[0].mxu0 %v81
    %v199 = vpop.f32.mrb[0].mxu0
    %v200 = vadd.f32 0.0, %v199
    %v201 = vpop.f32.mrb[0].mxu0
    %202 = vmatprep.mubr.f32.mxu0 0.0
    %203 = vmatmul.mubr.f32.gmra.mrb[0].mxu0 %v82
    %v204 = vpop.f32.mrb[0].mxu0
    %v205 = vadd.f32 0.0, %v204
    %v206 = vpop.f32.mrb[0].mxu0
    %207 = vmatprep.mubr.f32.mxu0 0.0
    %208 = vmatmul.mubr.f32.gmra.mrb[0].mxu0 %v83
    %v209 = vpop.f32.mrb[0].mxu0
    %v210 = vadd.f32 0.0, %v209
    %v211 = vpop.f32.mrb[0].mxu0
    %212 = vmatprep.mubr.f32.mxu0 0.0
    %213 = vmatmul.mubr.f32.gmra.mrb[0].mxu0 %v84
    %v214 = vpop.f32.mrb[0].mxu0
    %v215 = vadd.f32 0.0, %v214
    %v216 = vpop.f32.mrb[0].mxu0
    %217 = vmatprep.mubr.f32.mxu0 0.0
    %218 = vmatmul.mubr.f32.gmra.mrb[0].mxu0 %v85
    %v219 = vpop.f32.mrb[0].mxu0
    %v220 = vadd.f32 0.0, %v219
    %v221 = vpop.f32.mrb[0].mxu0
    %222 = vmatprep.mubr.f32.mxu0 0.0
    %223 = vmatmul.mubr.f32.gmra.mrb[0].mxu0 %v86
    %v224 = vpop.f32.mrb[0].mxu0
    %v225 = vadd.f32 0.0, %v224
    %v226 = vpop.f32.mrb[0].mxu0
    %227 = vmatprep.mubr.f32.mxu0 0.0
    %228 = vmatmul.mubr.f32.gmra.mrb[0].mxu0 %v87
    %v229 = vpop.f32.mrb[0].mxu0
    %v230 = vadd.f32 0.0, %v229
    %v231 = vpop.f32.mrb[0].mxu0
    %232 = vmatprep.mubr.f32.mxu0 0.0
    %233 = vmatmul.mubr.f32.gmra.mrb[0].mxu0 %v88
    %v234 = vpop.f32.mrb[0].mxu0
    %v235 = vadd.f32 0.0, %v234
    %v236 = vpop.f32.mrb[0].mxu0
    %237 = vmatprep.mubr.f32.mxu0 0.0
    %238 = vmatmul.mubr.f32.gmra.mrb[0].mxu0 %v89
    %v239 = vpop.f32.mrb[0].mxu0
    %v240 = vadd.f32 0.0, %v239
    %v241 = vpop.f32.mrb[0].mxu0
    %242 = vmatprep.mubr.f32.mxu0 0.0
    %243 = vmatmul.mubr.f32.gmra.mrb[0].mxu0 %v90
    %v244 = vpop.f32.mrb[0].mxu0
    %v245 = vadd.f32 0.0, %v244
    %v246 = vpop.f32.mrb[0].mxu0
    %247 = vmatprep.mubr.f32.mxu0 0.0
    %248 = vmatmul.mubr.f32.gmra.mrb[0].mxu0 %v91
    %v249 = vpop.f32.mrb[0].mxu0
    %v250 = vadd.f32 0.0, %v249
    %v251 = vpop.f32.mrb[0].mxu0
    %252 = vdwg.mxu0
    %v253 = vadd.f32 %v60, %v175
    %v254 = vadd.f32 %v61, %v180
    %v255 = vadd.f32 %v62, %v185
    %v256 = vadd.f32 %v63, %v190
    %v257 = vadd.f32 %v64, %v195
    %v258 = vadd.f32 %v65, %v200
    %v259 = vadd.f32 %v66, %v205
    %v260 = vadd.f32 %v67, %v210
    %v261 = vadd.f32 %v68, %v215
    %v262 = vadd.f32 %v69, %v220
    %v263 = vadd.f32 %v70, %v225
    %v264 = vadd.f32 %v71, %v230
    %v265 = vadd.f32 %v72, %v235
    %v266 = vadd.f32 %v73, %v240
    %v267 = vadd.f32 %v74, %v245
    %v268 = vadd.f32 %v75, %v250
    %269 = vst [vmem:[#allocation7] sm:$0xff] %v253
    %270 = vst [vmem:[#allocation7 + $0x8] sm:$0xff] %v254
    %271 = vst [vmem:[#allocation7 + $0x10] sm:$0xff] %v255
    %272 = vst [vmem:[#allocation7 + $0x18] sm:$0xff] %v256
    %273 = vst [vmem:[#allocation7 + $0x20] sm:$0xff] %v257
    %274 = vst [vmem:[#allocation7 + $0x28] sm:$0xff] %v258
    %275 = vst [vmem:[#allocation7 + $0x30] sm:$0xff] %v259
    %276 = vst [vmem:[#allocation7 + $0x38] sm:$0xff] %v260
    %277 = vst [vmem:[#allocation7 + $0x40] sm:$0xff] %v261
    %278 = vst [vmem:[#allocation7 + $0x48] sm:$0xff] %v262
    %279 = vst [vmem:[#allocation7 + $0x50] sm:$0xff] %v263
    %280 = vst [vmem:[#allocation7 + $0x58] sm:$0xff] %v264
    %281 = vst [vmem:[#allocation7 + $0x60] sm:$0xff] %v265
    %282 = vst [vmem:[#allocation7 + $0x68] sm:$0xff] %v266
    %283 = vst [vmem:[#allocation7 + $0x70] sm:$0xff] %v267
    %284 = vst [vmem:[#allocation7 + $0x78] sm:$0xff] %v268
    // Predicated region
    $region22: #{tpu_custom_call.1} parent=1 // pred_check
      _
    $region23: #{tpu_custom_call.1} parent=1 // pred_check_branch
      %286 = sbr.rel (0) target = $region25
    $region24: #{tpu_custom_call.1} parent=1 // pred_region
      %s288 = ssub.s32 2048, 2048
      %289 = vsyncadd [#allocation4], %s288
      %s290 = sshll.u32 [#allocation7], 4
      %s291 = int_to_ptr.vmem [resolvable:$true] %s290
      %296 = dma.vmem_to_hbm [thread:$0]  %s291, 2048, %s2, [#allocation4], 128, 128, 8
    $region25: #{tpu_custom_call.1} parent=1 // pred_fallthru
      _
    // Predicated region
    $region26: #{tpu_custom_call.1} parent=1 // pred_check
      _
    $region27: #{tpu_custom_call.1} parent=1 // pred_check_branch
      %298 = sbr.rel (0) target = $region29
    $region28: #{tpu_custom_call.1} parent=1 // pred_region
      %299 = dma.done [#allocation4], 2048
    $region29: #{tpu_custom_call.1} parent=1 // pred_fallthru
      _
    %300 = vsyncpa [#allocation3], 1
    %301 = vsyncpa [#allocation6], 1
    %302 = vsyncpa [#allocation4], 1

</llo_original>
